<compile_context>
chip_gen: v5e
topology: v5e:2x2
jax: 0.10.0
libtpu: 0.0.40
codegen_flags: <defaults>
</compile_context>

<pallas_src>
import jax
import jax.numpy as jnp
from jax.experimental import pallas as pl
from jax.experimental.pallas import tpu as pltpu

_LANE = 128
_SUBLANE = 8


def _round_up(x, m):
    return (x + m - 1) // m * m


# --------------------------------------------------------------------------
# Kernels (all row-tiled over the node dimension; grid axis 0 is "parallel").
# --------------------------------------------------------------------------
def _xform_kernel(x_ref, w_ref, d_ref, o_ref):
    """o = dinv * (x @ w) for one row tile (pre-scaled layer-1 transform)."""
    xw = jnp.dot(x_ref[...], w_ref[...], preferred_element_type=jnp.float32)
    o_ref[...] = (d_ref[...] * xw).astype(o_ref.dtype)


def _agg_xform_kernel(a_ref, t_ref, d_ref, b_ref, w_ref, o_ref):
    """Layer-1 aggregation fused with the layer-2 feature transform.

    h = relu(dinv * (A_rows @ t) + b)      -> layer-1 output rows (kept in vregs)
    o = dinv * (h @ w)                     -> pre-scaled layer-2 transform rows
    """
    agg = jnp.dot(a_ref[...], t_ref[...], preferred_element_type=jnp.float32)
    h = jnp.maximum(d_ref[...] * agg + b_ref[...], 0.0)
    hw = jnp.dot(h.astype(jnp.bfloat16), w_ref[...],
                 preferred_element_type=jnp.float32)
    o_ref[...] = (d_ref[...] * hw).astype(o_ref.dtype)


def _agg_kernel(a_ref, t_ref, d_ref, b_ref, o_ref):
    """Final aggregation: o = dinv * (A_rows @ t) + b (no activation)."""
    agg = jnp.dot(a_ref[...], t_ref[...], preferred_element_type=jnp.float32)
    o_ref[...] = (d_ref[...] * agg + b_ref[...]).astype(o_ref.dtype)


# --------------------------------------------------------------------------
# Wrapper
# --------------------------------------------------------------------------
def sign_graph_reasoner_forward(x, edge_index, w1, b1, w2, b2, *,
                                row_tile=128, vmem_limit_bytes=None):
    """x: [N, F] f32, edge_index: [2, E] int32 (row 0 = src, row 1 = dst).

    w1: [F, H], b1: [1, H], w2: [H, O], b2: [1, O]   (PyG lin.weight transposed)
    On v5e/v6e with large row tiles, pass vmem_limit_bytes (e.g. 96 << 20).
    """
    n, f_in = x.shape
    hid = w1.shape[1]
    out = w2.shape[1]

    # ---- lane/sublane padding (lane-dense outputs & MXU-friendly dims) -----
    f_pad = _round_up(f_in, _LANE)
    h_pad = _round_up(hid, _LANE)
    o_pad = _round_up(out, _LANE)
    row_tile = min(row_tile, _round_up(n, _SUBLANE))
    row_tile = _round_up(row_tile, _SUBLANE)
    n_pad = _round_up(n, row_tile)
    grid = (n_pad // row_tile,)

    # ---- glue: raw dense adjacency (with self loops) + D^{-1/2} vector -----
    src, dst = edge_index[0], edge_index[1]
    a = jnp.zeros((n_pad, n_pad), jnp.float32)
    a = a.at[dst, src].add(1.0)                                   # src -> dst
    diag = jnp.arange(n)
    a = a.at[diag, diag].add(1.0)                                 # self loops
    deg = jnp.sum(a, axis=1)
    dinv = jnp.where(deg > 0, jax.lax.rsqrt(deg), 0.0).reshape(n_pad, 1)
    a_bf = a.astype(jnp.bfloat16)        # small integer counts: exact in bf16

    def pad2(m, rows, cols, dtype):
        return jnp.pad(
            m, ((0, rows - m.shape[0]), (0, cols - m.shape[1]))).astype(dtype)

    x_p = pad2(x, n_pad, f_pad, jnp.bfloat16)
    w1_p = pad2(w1, f_pad, h_pad, jnp.bfloat16)
    w2_p = pad2(w2, h_pad, o_pad, jnp.bfloat16)
    b1_p = pad2(b1.reshape(1, -1), 1, h_pad, jnp.float32)
    b2_p = pad2(b2.reshape(1, -1), 1, o_pad, jnp.float32)

    cparams = pltpu.CompilerParams(
        dimension_semantics=("parallel",),
        vmem_limit_bytes=vmem_limit_bytes,
    )

    def row_spec(cols):
        return pl.BlockSpec((row_tile, cols), lambda i: (i, 0))

    def full_spec(rows, cols):
        return pl.BlockSpec((rows, cols), lambda i: (0, 0))

    # Stage 1: t1 = dinv * (X @ W1)            [N_pad, h_pad] bf16
    t1 = pl.pallas_call(
        _xform_kernel,
        grid=grid,
        in_specs=[row_spec(f_pad), full_spec(f_pad, h_pad), row_spec(1)],
        out_specs=row_spec(h_pad),
        out_shape=jax.ShapeDtypeStruct((n_pad, h_pad), jnp.bfloat16),
        compiler_params=cparams,
    )(x_p, w1_p, dinv)

    # Stage 2: t2 = dinv * (relu(dinv * (A @ t1) + b1) @ W2)   [N_pad, o_pad] bf16
    t2 = pl.pallas_call(
        _agg_xform_kernel,
        grid=grid,
        in_specs=[row_spec(n_pad), full_spec(n_pad, h_pad), row_spec(1),
                  full_spec(1, h_pad), full_spec(h_pad, o_pad)],
        out_specs=row_spec(o_pad),
        out_shape=jax.ShapeDtypeStruct((n_pad, o_pad), jnp.bfloat16),
        compiler_params=cparams,
    )(a_bf, t1, dinv, b1_p, w2_p)

    # Stage 3: Y = dinv * (A @ t2) + b2         [N_pad, o_pad] f32
    y = pl.pallas_call(
        _agg_kernel,
        grid=grid,
        in_specs=[row_spec(n_pad), full_spec(n_pad, o_pad), row_spec(1),
                  full_spec(1, o_pad)],
        out_specs=row_spec(o_pad),
        out_shape=jax.ShapeDtypeStruct((n_pad, o_pad), jnp.float32),
        compiler_params=cparams,
    )(a_bf, t2, dinv, b2_p)

    return y[:n, :out]


def _glorot(key, fan_in, fan_out):
    limit = jnp.sqrt(6.0 / (fan_in + fan_out))
    return jax.random.uniform(key, (fan_in, fan_out), jnp.float32, -limit, limit)


if __name__ == "__main__":
    # Small shapes consistent with the module's forward.
    num_nodes = 16
    node_features = 8
    hidden_dim = 32
    output_dim = 16

    key = jax.random.PRNGKey(0)
    k_x, k_w1, k_w2 = jax.random.split(key, 3)

    # Deterministic node features and a deterministic ring graph (both directions).
    x = jax.random.normal(k_x, (num_nodes, node_features), dtype=jnp.float32)
    idx = jnp.arange(num_nodes, dtype=jnp.int32)
    src = jnp.concatenate([idx, (idx + 1) % num_nodes])
    dst = jnp.concatenate([(idx + 1) % num_nodes, idx])
    edge_index = jnp.stack([src, dst], axis=0)  # [2, 32]

    # Parameters (GCNConv: glorot weight, zero bias), stored as [in, out].
    w1 = _glorot(k_w1, node_features, hidden_dim)
    b1 = jnp.zeros((1, hidden_dim), dtype=jnp.float32)
    w2 = _glorot(k_w2, hidden_dim, output_dim)
    b2 = jnp.zeros((1, output_dim), dtype=jnp.float32)

    # row_tile=8 at this toy size so the parallel grid actually has >1 step.
    y = sign_graph_reasoner_forward(x, edge_index, w1, b1, w2, b2, row_tile=8)
    jax.block_until_ready(y)

    # Pure-JAX f32 reference check (kernel uses bf16 operands / f32 accumulation,
    # so tolerance is loosened accordingly).
    a = jnp.zeros((num_nodes, num_nodes), jnp.float32).at[dst, src].add(1.0) + jnp.eye(num_nodes)
    d = 1.0 / jnp.sqrt(jnp.sum(a, axis=1))
    a_hat = d[:, None] * a * d[None, :]
    h_ref = jnp.maximum(a_hat @ (x @ w1) + b1, 0.0)
    y_ref = a_hat @ (h_ref @ w2) + b2
    assert y.shape == y_ref.shape
    assert jnp.allclose(y, y_ref, atol=5e-2, rtol=5e-2)

    print("KERNEL_OK")
</pallas_src>

<mosaic_0001>
module attributes {stable_mosaic.version = 11 : i64} {
  func.func @_xform_kernel(%arg0: i32, %arg1: memref<8x128xbf16, #tpu.memory_space<vmem>>, %arg2: memref<128x128xbf16, #tpu.memory_space<vmem>>, %arg3: memref<8x1xf32, #tpu.memory_space<vmem>>, %arg4: memref<8x128xbf16, #tpu.memory_space<vmem>>) attributes {dimension_semantics = [#tpu.dimension_semantics<parallel>], iteration_bounds = array<i64: 2>, scalar_prefetch = 0 : i64, scratch_operands = 0 : i64, tpu.core_type = #tpu.core_type<tc>, window_params = [{transform_indices = @transform_0, window_bounds = array<i64: 8, 128>}, {pipeline_mode = #tpu.pipeline_mode<synchronous>, transform_indices = @transform_1, window_bounds = array<i64: 128, 128>}, {transform_indices = @transform_2, window_bounds = array<i64: 8, 1>}, {transform_indices = @transform_3, window_bounds = array<i64: 8, 128>}]} {
    %c0 = arith.constant 0 : index
    %c0_0 = arith.constant 0 : index
    %0 = vector.load %arg1[%c0, %c0_0] : memref<8x128xbf16, #tpu.memory_space<vmem>>, vector<8x128xbf16>
    %c0_1 = arith.constant 0 : index
    %c0_2 = arith.constant 0 : index
    %1 = vector.load %arg2[%c0_1, %c0_2] : memref<128x128xbf16, #tpu.memory_space<vmem>>, vector<128x128xbf16>
    %cst = arith.constant dense<0.000000e+00> : vector<8x128xf32>
    %2 = tpu.matmul %0, %1, %cst {dimension_numbers = #tpu.dot_dimension_numbers<[1], [0], [0], [1], [0, 0, 1, 1], [], []>} : vector<8x128xbf16>, vector<128x128xbf16>, vector<8x128xf32> -> vector<8x128xf32>
    %c0_3 = arith.constant 0 : index
    %c0_4 = arith.constant 0 : index
    %3 = vector.load %arg3[%c0_3, %c0_4] : memref<8x1xf32, #tpu.memory_space<vmem>>, vector<8x1xf32>
    %4 = vector.broadcast %3 : vector<8x1xf32> to vector<8x128xf32>
    %5 = arith.mulf %4, %2 : vector<8x128xf32>
    %6 = arith.truncf %5 : vector<8x128xf32> to vector<8x128xbf16>
    %c0_5 = arith.constant 0 : index
    %c0_6 = arith.constant 0 : index
    %7 = vector.load %arg4[%c0_5, %c0_6] : memref<8x128xbf16, #tpu.memory_space<vmem>>, vector<8x128xbf16>
    tpu.vector_store %arg4[%c0_5, %c0_6], %6 {strides = array<i32>} : memref<8x128xbf16, #tpu.memory_space<vmem>>, vector<8x128xbf16>,
    return
  }
  func.func @transform_0(%arg0: i32) -> (i32, i32) {
    %c0_i32 = arith.constant 0 : i32
    %c0_i32_0 = arith.constant 0 : i32
    return %arg0, %c0_i32 : i32, i32
  }
  func.func @transform_1(%arg0: i32) -> (i32, i32) {
    %c0_i32 = arith.constant 0 : i32
    %c0_i32_0 = arith.constant 0 : i32
    %c0_i32_1 = arith.constant 0 : i32
    return %c0_i32, %c0_i32_0 : i32, i32
  }
  func.func @transform_2(%arg0: i32) -> (i32, i32) {
    %c0_i32 = arith.constant 0 : i32
    %c0_i32_0 = arith.constant 0 : i32
    return %arg0, %c0_i32 : i32, i32
  }
  func.func @transform_3(%arg0: i32) -> (i32, i32) {
    %c0_i32 = arith.constant 0 : i32
    %c0_i32_0 = arith.constant 0 : i32
    return %arg0, %c0_i32 : i32, i32
  }
}

</mosaic_0001>

<llo_original>
// kernel: tpu_custom_call.1
$region0: #{tpu_custom_call.1}
  #allocation0 [shape = 'u32[]', space=smem, size = 0x4, offset = 0x4, fixed_abs, tag = 'smem constant byte address 0x4 - core index']
  #allocation1 [shape = 'u32[72,128]{1,0:T(1,128)}', space=vmem, size = 0x9000, scoped, tag = 'internal scratch']
  %s0 = inlined_call_operand.vmem [shape: bf16[16,128], index: 0, kind: input, shape index: {}]
  %s1 = inlined_call_operand.hbm [shape: bf16[128,128], index: 1, kind: input, shape index: {}]
  %s2 = inlined_call_operand.vmem [shape: f32[16,1], index: 2, kind: input, shape index: {}]
  %s3 = inlined_call_operand.hbm [shape: bf16[16,128], index: 3, kind: output, shape index: {}]
  %s4 = sld [smem:[#allocation0]]
  $region49: #{tpu_custom_call.1} parent=0
    _
  %s6 = ssub.s32 1, %s4
  %s7 = scalar_select 0, %s6, %s4
  $region1: #{tpu_custom_call.1} parent=0
    #allocation2 [shape = 'u8[32768]{0}', space=vmem, size = 0x8000, scoped, tag = 'input window, operand 1, single buffered']
    #allocation3 [shape = 's32[2]{0}', space=sflag, size = 0x8, scoped, tag = 'scoped memory for tpu_custom_call.1']
    #allocation4 [shape = 's32[2]{0}', space=sflag, size = 0x8, scoped, tag = 'scoped memory for tpu_custom_call.1']
    #allocation5 [shape = 'u8[4096]{0}', space=vmem, size = 0x1000, scoped, tag = 'output window, operand 0']
    %8 = vsyncpa [#allocation3], 0
    %9 = vsyncpa [#allocation4], 0
    %s10 = scalar_lea.sflag [#allocation4], 1
    %11 = vsyncpa %s10, 0
    loop: start=0, step=1, limit=4
    $region2: #{tpu_custom_call.1} parent=1 // loop_pre_header
      _
    $region3: #{tpu_custom_call.1} parent=1 // loop_header
      %s13 = sphi 0, %s17
      %p14 = scmp.ge.s32.totalorder %s13, 4
      %s23 = sphi 0, %s25
      %s26 = sphi 0, %s23
      %s27 = sphi 0, %s26
      %s43 = sphi 0, %s27
      %s47 = sphi 0, %s47
      %s49 = sphi 0, %s47
      %s50 = sphi 0, %s49
      %s64 = sphi 0, %s50
      %s70 = sphi 0, %s72
      %s73 = sphi 0, %s70
      %s74 = sphi 0, %s73
      %s90 = sphi 0, %s74
      %s96 = sphi 0, %s98
      %s99 = sphi 0, %s96
      %s100 = sphi 0, %s99
      %s116 = sphi 0, %s100
    $region4: #{tpu_custom_call.1} parent=1 // loop_header_branch
      %16 = sbr.rel (%p14) target = $region8
    $region5: #{tpu_custom_call.1} parent=1 // loop_body
      %s18 = ssub.s32 %s13, 1
      %s19 = ssub.s32 %s13, 2
      %s20 = sadd.s32 %s13, 1
      %s21 = ssub.s32 %s13, %s20
      %p22 = scmp.eq.s32.totalorder %s21, 0
      %s24 = sadd.s32 %s23, 1
      %s25 = scalar_select %p22, %s23, %s24
      %p28 = pneg %p22
      %p29 = scmp.eq.s32.totalorder %s13, 1
      %p30 = por %p28, %p29
      %p31 = scmp.ne.s32.totalorder %s23, %s26
      %p32 = scmp.eq.s32.totalorder %s13, 0
      %p33 = por %p31, %p32
      %p34 = scmp.ne.s32.totalorder %s23, %s26
      %p35 = scmp.eq.s32.totalorder %s18, 1
      %p36 = por %p34, %p35
      %p37 = scmp.ne.s32.totalorder %s26, %s27
      %p38 = scmp.eq.s32.totalorder %s18, 0
      %p39 = por %p37, %p38
      %p40 = scmp.ne.s32.totalorder %s26, %s27
      %p41 = scmp.eq.s32.totalorder %s19, 1
      %p42 = por %p40, %p41
      %p44 = scmp.ne.s32.totalorder %s27, %s43
      %p45 = scmp.eq.s32.totalorder %s19, 0
      %p46 = por %p44, %p45
      %s48 = sadd.s32 %s47, 1
      %p51 = scmp.eq.s32.totalorder %s13, 1
      %p52 = scmp.ne.s32.totalorder %s47, %s49
      %p53 = scmp.eq.s32.totalorder %s13, 0
      %p54 = por %p52, %p53
      %p55 = scmp.ne.s32.totalorder %s47, %s49
      %p56 = scmp.eq.s32.totalorder %s18, 1
      %p57 = por %p55, %p56
      %p58 = scmp.ne.s32.totalorder %s49, %s50
      %p59 = scmp.eq.s32.totalorder %s18, 0
      %p60 = por %p58, %p59
      %p61 = scmp.ne.s32.totalorder %s49, %s50
      %p62 = scmp.eq.s32.totalorder %s19, 1
      %p63 = por %p61, %p62
      %p65 = scmp.ne.s32.totalorder %s50, %s64
      %p66 = scmp.eq.s32.totalorder %s19, 0
      %p67 = por %p65, %p66
      %s68 = ssub.s32 %s13, %s20
      %p69 = scmp.eq.s32.totalorder %s68, 0
      %s71 = sadd.s32 %s70, 1
      %s72 = scalar_select %p69, %s70, %s71
      %p75 = pneg %p69
      %p76 = scmp.eq.s32.totalorder %s13, 1
      %p77 = por %p75, %p76
      %p78 = scmp.ne.s32.totalorder %s70, %s73
      %p79 = scmp.eq.s32.totalorder %s13, 0
      %p80 = por %p78, %p79
      %p81 = scmp.ne.s32.totalorder %s70, %s73
      %p82 = scmp.eq.s32.totalorder %s18, 1
      %p83 = por %p81, %p82
      %p84 = scmp.ne.s32.totalorder %s73, %s74
      %p85 = scmp.eq.s32.totalorder %s18, 0
      %p86 = por %p84, %p85
      %p87 = scmp.ne.s32.totalorder %s73, %s74
      %p88 = scmp.eq.s32.totalorder %s19, 1
      %p89 = por %p87, %p88
      %p91 = scmp.ne.s32.totalorder %s74, %s90
      %p92 = scmp.eq.s32.totalorder %s19, 0
      %p93 = por %p91, %p92
      %s94 = ssub.s32 %s13, %s20
      %p95 = scmp.eq.s32.totalorder %s94, 0
      %s97 = sadd.s32 %s96, 1
      %s98 = scalar_select %p95, %s96, %s97
      %p101 = pneg %p95
      %p102 = scmp.eq.s32.totalorder %s13, 1
      %p103 = por %p101, %p102
      %p104 = scmp.ne.s32.totalorder %s96, %s99
      %p105 = scmp.eq.s32.totalorder %s13, 0
      %p106 = por %p104, %p105
      %p107 = scmp.ne.s32.totalorder %s96, %s99
      %p108 = scmp.eq.s32.totalorder %s18, 1
      %p109 = por %p107, %p108
      %p110 = scmp.ne.s32.totalorder %s99, %s100
      %p111 = scmp.eq.s32.totalorder %s18, 0
      %p112 = por %p110, %p111
      %p113 = scmp.ne.s32.totalorder %s99, %s100
      %p114 = scmp.eq.s32.totalorder %s19, 1
      %p115 = por %p113, %p114
      %p117 = scmp.ne.s32.totalorder %s100, %s116
      %p118 = scmp.eq.s32.totalorder %s19, 0
      %p119 = por %p117, %p118
      %p120 = scmp.le.s32.totalorder 1, %s13
      %p121 = scmp.lt.s32.totalorder %s13, 3
      %p122 = pnand %p120, %p121
      %p123 = pneg %p122
      // Predicated region
      $region9: #{tpu_custom_call.1} parent=5 // pred_check
        _
      $region10: #{tpu_custom_call.1} parent=5 // pred_check_branch
        %125 = sbr.rel (%p122) target = $region12
      $region11: #{tpu_custom_call.1} parent=5 // pred_region
        %s126 = ssub.s32 %s13, 1
        // Predicated region
        $region13: #{tpu_custom_call.1} parent=11 // pred_check
          %p127 = pneg %p60
        $region14: #{tpu_custom_call.1} parent=11 // pred_check_branch
          %129 = sbr.rel (%p127) target = $region16
        $region15: #{tpu_custom_call.1} parent=11 // pred_region
          %131 = vsyncadd [#allocation3], 0
          %s132 = sshll.u32 %s1, 4
          %s133 = int_to_ptr.hbm [resolvable:$true] %s132
          %s134 = sshll.u32 [#allocation2], 4
          %s135 = int_to_ptr.vmem [resolvable:$true] %s134
          %140 = dma.hbm_to_vmem [thread:$0]  %s133, 1024, %s135, [#allocation3], 64, 64, 4
        $region16: #{tpu_custom_call.1} parent=11 // pred_fallthru
          _
      $region12: #{tpu_custom_call.1} parent=5 // pred_fallthru
        _
      %p141 = scmp.lt.s32.totalorder %s13, 2
      // Predicated region
      $region17: #{tpu_custom_call.1} parent=5 // pred_check
        %p142 = pneg %p141
      $region18: #{tpu_custom_call.1} parent=5 // pred_check_branch
        %144 = sbr.rel (%p142) target = $region20
      $region19: #{tpu_custom_call.1} parent=5 // pred_region
        // Predicated region
        $region21: #{tpu_custom_call.1} parent=19 // pred_check
          %p145 = pneg %p33
        $region22: #{tpu_custom_call.1} parent=19 // pred_check_branch
          %147 = sbr.rel (%p145) target = $region24
        $region23: #{tpu_custom_call.1} parent=19 // pred_region
          %p148 = scmp.lt.s32.totalorder %s13, 1
          %s149 = scalar_select %p148, %s13, 1
          %s150 = smul.addr %s149, 4
          %s151 = scalar_lea.vmem %s0, %s150
        $region24: #{tpu_custom_call.1} parent=19 // pred_fallthru
          _
        // Predicated region
        $region25: #{tpu_custom_call.1} parent=19 // pred_check
          %p152 = pneg %p80
        $region26: #{tpu_custom_call.1} parent=19 // pred_check_branch
          %154 = sbr.rel (%p152) target = $region28
        $region27: #{tpu_custom_call.1} parent=19 // pred_region
          %p155 = scmp.lt.s32.totalorder %s13, 1
          %s156 = scalar_select %p155, %s13, 1
          %s157 = smul.addr %s156, 8
          %s158 = scalar_lea.vmem %s2, %s157
        $region28: #{tpu_custom_call.1} parent=19 // pred_fallthru
          _
      $region20: #{tpu_custom_call.1} parent=5 // pred_fallthru
        _
      %p159 = scmp.le.s32.totalorder 1, %s13
      %p160 = scmp.lt.s32.totalorder %s13, 3
      %p161 = pnand %p159, %p160
      %p162 = pneg %p161
      // Predicated region
      $region29: #{tpu_custom_call.1} parent=5 // pred_check
        _
      $region30: #{tpu_custom_call.1} parent=5 // pred_check_branch
        %164 = sbr.rel (%p161) target = $region32
      $region31: #{tpu_custom_call.1} parent=5 // pred_region
        %s165 = ssub.s32 %s13, 1
        // Predicated region
        $region33: #{tpu_custom_call.1} parent=31 // pred_check
          %p166 = pneg %p60
        $region34: #{tpu_custom_call.1} parent=31 // pred_check_branch
          %168 = sbr.rel (%p166) target = $region36
        $region35: #{tpu_custom_call.1} parent=31 // pred_region
          %170 = dma.done [#allocation3], 1024
        $region36: #{tpu_custom_call.1} parent=31 // pred_fallthru
          _
        %p171 = scmp.lt.s32.totalorder %s18, 1
        %s172 = scalar_select %p171, %s18, 1
        %s173 = smul.addr %s172, 4
        %s174 = scalar_lea.vmem %s0, %s173
        %p175 = pneg %p39
        %p176 = pneg %p36
        %p177 = pneg %p60
        %p178 = pneg %p57
        %p179 = scmp.lt.s32.totalorder %s18, 1
        %s180 = scalar_select %p179, %s18, 1
        %s181 = smul.addr %s180, 8
        %s182 = scalar_lea.vmem %s2, %s181
        %p183 = pneg %p86
        %p184 = pneg %p83
        %p185 = pneg %p112
        %p186 = pneg %p109
        %s187 = sand.u32 %s99, 1
        %s188 = scalar_lea.sflag [#allocation4], %s187
        %s189 = sand.u32 %s99, 1
        %s190 = smul.addr %s189, 4
        %s191 = scalar_lea.vmem [#allocation5], %s190
        %p192 = scmp.lt.s32.totalorder %s18, 1
        %s193 = scalar_select %p192, %s18, 1
        %s194 = smul.addr %s193, 4
        %s195 = scalar_lea.vmem %s0, %s194
        %p196 = scmp.lt.s32.totalorder %s18, 1
        %s197 = scalar_select %p196, %s18, 1
        %s198 = smul.addr %s197, 8
        %s199 = scalar_lea.vmem %s2, %s198
        %v200 = vld [vmem:[%s195] sm:$0xf]
        %v201 = vld [vmem:[#allocation2] sm:$0xf]
        %v202 = vld [vmem:[#allocation2 + $0x4] sm:$0xf]
        %v203 = vld [vmem:[#allocation2 + $0x8] sm:$0xf]
        %v204 = vld [vmem:[#allocation2 + $0xc] sm:$0xf]
        %v205 = vld [vmem:[#allocation2 + $0x10] sm:$0xf]
        %v206 = vld [vmem:[#allocation2 + $0x14] sm:$0xf]
        %v207 = vld [vmem:[#allocation2 + $0x18] sm:$0xf]
        %v208 = vld [vmem:[#allocation2 + $0x1c] sm:$0xf]
        %v209 = vld [vmem:[#allocation2 + $0x20] sm:$0xf]
        %v210 = vld [vmem:[#allocation2 + $0x24] sm:$0xf]
        %v211 = vld [vmem:[#allocation2 + $0x28] sm:$0xf]
        %v212 = vld [vmem:[#allocation2 + $0x2c] sm:$0xf]
        %v213 = vld [vmem:[#allocation2 + $0x30] sm:$0xf]
        %v214 = vld [vmem:[#allocation2 + $0x34] sm:$0xf]
        %v215 = vld [vmem:[#allocation2 + $0x38] sm:$0xf]
        %v216 = vld [vmem:[#allocation2 + $0x3c] sm:$0xf]
        %v233 = vunpack.c.l.b16 %v201
        %v234 = vunpack.c.l.b16 %v202
        %v235 = vunpack.c.l.b16 %v203
        %v236 = vunpack.c.l.b16 %v204
        %v237 = vunpack.c.l.b16 %v205
        %v238 = vunpack.c.l.b16 %v206
        %v239 = vunpack.c.l.b16 %v207
        %v240 = vunpack.c.l.b16 %v208
        %v241 = vunpack.c.l.b16 %v209
        %v242 = vunpack.c.l.b16 %v210
        %v243 = vunpack.c.l.b16 %v211
        %v244 = vunpack.c.l.b16 %v212
        %v245 = vunpack.c.l.b16 %v213
        %v246 = vunpack.c.l.b16 %v214
        %v247 = vunpack.c.l.b16 %v215
        %v248 = vunpack.c.l.b16 %v216
        %v249 = vpack.c.b16 %v234, %v233
        %v250 = vpack.c.b16 %v236, %v235
        %v251 = vpack.c.b16 %v238, %v237
        %v252 = vpack.c.b16 %v240, %v239
        %v253 = vpack.c.b16 %v242, %v241
        %v254 = vpack.c.b16 %v244, %v243
        %v255 = vpack.c.b16 %v246, %v245
        %v256 = vpack.c.b16 %v248, %v247
        %265 = vmatpush.bf16.msra.mxu0 %v256
        %266 = vmatpush.bf16.msra.mxu0 %v255
        %267 = vmatpush.bf16.msra.mxu0 %v254
        %268 = vmatpush.bf16.msra.mxu0 %v253
        %269 = vmatpush.bf16.msra.mxu0 %v252
        %270 = vmatpush.bf16.msra.mxu0 %v251
        %271 = vmatpush.bf16.msra.mxu0 %v250
        %272 = vmatpush.bf16.msra.mxu0 %v249
        %273 = vmatmul.bf16.gmra.mxu0 %v200
        %v274 = vpop.f32.mrf.mxu0
        %v275 = vadd.f32 0.0, %v274
        %v276 = vpop.f32.mrf.mxu0
        %277 = vdwg.mxu0
        %v278 = vld [vmem:[%s199] sm:$0xff]
        %280 = vset.pattern.permute.xlu0 0
        %281 = vperm.xlu0 %280, %v278
        %v282 = vpop.permute.xlu0 %281
        %v284 = vmul.f32 %v282, %v275
        %v285 = vpack.c.bf16 %v284, %v284
        %286 = vst [vmem:[%s191] sm:$0xf] %v285
        %s287 = sand.u32 %s99, 1
        %s288 = scalar_lea.sflag [#allocation4], %s287
        %s289 = sand.u32 %s99, 1
        %s290 = smul.addr %s289, 4
        %s291 = scalar_lea.vmem [#allocation5], %s290
        // Predicated region
        $region37: #{tpu_custom_call.1} parent=31 // pred_check
          %p292 = pneg %p109
        $region38: #{tpu_custom_call.1} parent=31 // pred_check_branch
          %294 = sbr.rel (%p292) target = $region40
        $region39: #{tpu_custom_call.1} parent=31 // pred_region
          %296 = vsyncadd %s288, 0
          %s297 = smul.addr %s18, 4
          %s298 = scalar_lea.hbm %s3, %s297
          %s300 = sshll.u32 %s291, 4
          %s301 = int_to_ptr.vmem [resolvable:$true] %s300
          %s302 = sshll.u32 %s298, 4
          %s303 = int_to_ptr.hbm [resolvable:$true] %s302
          %305 = dma.vmem_to_hbm [thread:$0]  %s301, 64, %s303, %s288
        $region40: #{tpu_custom_call.1} parent=31 // pred_fallthru
          _
      $region32: #{tpu_custom_call.1} parent=5 // pred_fallthru
        _
      %p306 = scmp.le.s32.totalorder 2, %s13
      // Predicated region
      $region41: #{tpu_custom_call.1} parent=5 // pred_check
        %p307 = pneg %p306
      $region42: #{tpu_custom_call.1} parent=5 // pred_check_branch
        %309 = sbr.rel (%p307) target = $region44
      $region43: #{tpu_custom_call.1} parent=5 // pred_region
        %s310 = ssub.s32 %s13, 2
        // Predicated region
        $region45: #{tpu_custom_call.1} parent=43 // pred_check
          %p311 = pneg %p115
        $region46: #{tpu_custom_call.1} parent=43 // pred_check_branch
          %313 = sbr.rel (%p311) target = $region48
        $region47: #{tpu_custom_call.1} parent=43 // pred_region
          %s314 = sand.u32 %s100, 1
          %s315 = scalar_lea.sflag [#allocation4], %s314
          %s316 = sand.u32 %s100, 1
          %s317 = smul.addr %s316, 4
          %s318 = scalar_lea.vmem [#allocation5], %s317
          %320 = dma.done %s315, 64
        $region48: #{tpu_custom_call.1} parent=43 // pred_fallthru
          _
      $region44: #{tpu_custom_call.1} parent=5 // pred_fallthru
        _
    $region6: #{tpu_custom_call.1} parent=1 // loop_footer
      %s17 = sadd.s32 1, %s13
    $region7: #{tpu_custom_call.1} parent=1 // loop_footer_branch
      %12 = sbr.rel target = $region3
    $region8: #{tpu_custom_call.1} parent=1 // loop_exit
      _
    %321 = vsyncpa [#allocation3], 1
    %s322 = scalar_lea.sflag [#allocation3], 1
    %323 = vsyncpa %s322, 1
    %324 = vsyncpa [#allocation4], 1
    %s325 = scalar_lea.sflag [#allocation4], 1
    %326 = vsyncpa %s325, 1

</llo_original>
